<compile_context>
chip_gen: v7x
topology: tpu7x:2x2x1
jax: 0.10.0
libtpu: 0.0.40
codegen_flags: <defaults>
</compile_context>

<pallas_src>
import functools

import jax
import jax.numpy as jnp
from jax import lax
from jax.experimental import pallas as pl
from jax.experimental.pallas import tpu as pltpu


def _rasterize_kernel(counts_ref, fids_ref, coef_ref, xg_ref, yg_ref, out_ref,
                      *, F, D, num_tiles):
    """One grid step == (batch element, pixel tile).

    counts_ref : SMEM (N*num_tiles,) int32   -- number of binned faces for this tile
    fids_ref   : SMEM (N*num_tiles, F) int32 -- binned face indices (padded)
    coef_ref   : SMEM (9 + 3*D, N*F) f32 per-face plane coefficients:
                 rows 0..5   : A0,B0,C0,A1,B1,C1   (bary_i = A*x + B*y + C, /area)
                 rows 6..8   : Az,Bz,Cz            (depth  = Az*x + Bz*y + Cz)
                 rows 9+3d+k : Aa_d,Ba_d,Ca_d      (attr_d plane)
    xg_ref     : VMEM (PT, 128) pixel NDC x for this tile
    yg_ref     : VMEM (PT, 128) pixel NDC y for this tile
    out_ref    : VMEM (1, D+1, PT, 128)
    """
    n = pl.program_id(0)
    t = pl.program_id(1)
    base = n * F
    row = n * num_tiles + t
    count = counts_ref[row]

    xf = xg_ref[...]
    yf = yg_ref[...]
    big = jnp.float32(1e10)

    def body(f, carry):
        best_z, attr = carry
        col = base + fids_ref[row, f]
        A0 = coef_ref[0, col]; B0 = coef_ref[1, col]; C0 = coef_ref[2, col]
        A1 = coef_ref[3, col]; B1 = coef_ref[4, col]; C1 = coef_ref[5, col]
        Az = coef_ref[6, col]; Bz = coef_ref[7, col]; Cz = coef_ref[8, col]

        # barycentrics and depth as affine planes (pre-divided by signed area)
        b0 = A0 * xf + B0 * yf + C0
        b1 = A1 * xf + B1 * yf + C1
        b2 = 1.0 - b0 - b1                      # partition of unity
        pz = Az * xf + Bz * yf + Cz

        inside = jnp.minimum(b0, jnp.minimum(b1, b2)) > 0.0
        # cull behind image plane; faces_per_pixel == 1 -> keep nearest
        better = inside & (pz >= 0.0) & (pz < best_z)

        new_best = jnp.where(better, pz, best_z)
        new_attr = []
        for d in range(D):
            Aa = coef_ref[9 + 3 * d, col]
            Ba = coef_ref[10 + 3 * d, col]
            Ca = coef_ref[11 + 3 * d, col]
            interp = Aa * xf + Ba * yf + Ca
            new_attr.append(jnp.where(better, interp, attr[d]))
        return new_best, tuple(new_attr)

    init = (
        jnp.full(xf.shape, big, jnp.float32),
        tuple(jnp.zeros(xf.shape, jnp.float32) for _ in range(D)),
    )
    best_z, attr = lax.fori_loop(0, count, body, init)

    # background pixels (pix_to_face == -1) stay exactly 0, like pixel_vals[mask] = 0
    vis = (best_z < big).astype(jnp.float32)
    for d in range(D):
        out_ref[0, d] = attr[d]
    out_ref[0, D] = vis


def pytorch3d_rasterizer_forward(vertices, faces, attributes, image_size=224):
    """JAX/Pallas equivalent of Pytorch3dRasterizer.forward.

    vertices  : (N, V, 3) float    -- screen-space verts (x, y in NDC, z = depth)
    faces     : (N, F, 3) int      -- vertex indices per face
    attributes: (N, F, 3, D) float -- per-face-vertex attributes
    returns   : (N, D+1, H, W) float32 (NCHW; last channel is the vis mask)
    """
    vertices = vertices.astype(jnp.float32)
    attributes = attributes.astype(jnp.float32)
    faces = faces.astype(jnp.int32)
    N = vertices.shape[0]
    F = faces.shape[1]
    D = attributes.shape[-1]
    H = W = int(image_size)
    HW = H * W

    # ---- lane-dense pixel layout: flatten HxW -> (rows, 128) ---------------
    rows = -(-HW // 128)
    PT_target = 32 if D <= 4 else 16          # vreg-pressure-aware tile height
    if rows <= PT_target:
        PT = rows                              # one tile; block == full dim (legal)
    else:
        PT = PT_target                         # PT sublanes x 128 lanes per tile
        rows = -(-rows // PT) * PT             # pad so tiles divide evenly
    num_tiles = rows // PT
    HWp = rows * 128

    # PyTorch3D square-image NDC convention (+X left, +Y up)
    xs = 1.0 - (2.0 * jnp.arange(W, dtype=jnp.float32) + 1.0) / W
    ys = 1.0 - (2.0 * jnp.arange(H, dtype=jnp.float32) + 1.0) / H
    xg = jnp.broadcast_to(xs[None, :], (H, W)).reshape(HW)
    yg = jnp.broadcast_to(ys[:, None], (H, W)).reshape(HW)
    pad = HWp - HW
    xg = jnp.pad(xg, (0, pad), constant_values=2.0).reshape(rows, 128)
    yg = jnp.pad(yg, (0, pad), constant_values=2.0).reshape(rows, 128)

    # ---- per-face plane coefficients (hoisted out of the kernel) -----------
    fv = jax.vmap(lambda v, f: v[f])(vertices, faces)          # (N, F, 3, 3)
    x0, y0, z0 = fv[..., 0, 0], fv[..., 0, 1], fv[..., 0, 2]
    x1, y1, z1 = fv[..., 1, 0], fv[..., 1, 1], fv[..., 1, 2]
    x2, y2, z2 = fv[..., 2, 0], fv[..., 2, 1], fv[..., 2, 2]

    area = (x1 - x0) * (y2 - y0) - (y1 - y0) * (x2 - x0)
    degen = jnp.abs(area) <= jnp.float32(1e-8)
    inv_area = 1.0 / jnp.where(degen, jnp.float32(1.0), area)

    def _edge(ya, yb, xa, xb):
        # bary plane coefficients, pre-divided by the signed area
        A = (ya - yb) * inv_area
        B = (xb - xa) * inv_area
        C = (xa * yb - ya * xb) * inv_area
        # degenerate faces can never be hit: force bary == -1 everywhere
        A = jnp.where(degen, 0.0, A)
        B = jnp.where(degen, 0.0, B)
        C = jnp.where(degen, -1.0, C)
        return A, B, C

    A0, B0, C0 = _edge(y1, y2, x1, x2)
    A1, B1, C1 = _edge(y2, y0, x2, x0)
    A2, B2, C2 = _edge(y0, y1, x0, x1)

    Az = A0 * z0 + A1 * z1 + A2 * z2
    Bz = B0 * z0 + B1 * z1 + B2 * z2
    Cz = C0 * z0 + C1 * z1 + C2 * z2

    a0 = attributes[..., 0, :]                                 # (N, F, D)
    a1 = attributes[..., 1, :]
    a2 = attributes[..., 2, :]
    Aa = A0[..., None] * a0 + A1[..., None] * a1 + A2[..., None] * a2
    Ba = B0[..., None] * a0 + B1[..., None] * a1 + B2[..., None] * a2
    Ca = C0[..., None] * a0 + C1[..., None] * a1 + C2[..., None] * a2

    geo = jnp.stack([A0, B0, C0, A1, B1, C1, Az, Bz, Cz], axis=-1)   # (N, F, 9)
    att = jnp.stack([Aa, Ba, Ca], axis=-1).reshape(N, F, 3 * D)
    coef = jnp.concatenate([geo, att], axis=-1)                # (N, F, 9+3D)
    # SMEM wants the long axis last: (9+3D, N*F)
    coef = coef.reshape(N * F, 9 + 3 * D).T

    # ---- per-tile face binning (conservative) -------------------------------
    ymax = jnp.maximum(jnp.maximum(y0, y1), y2)                # (N, F)
    ymin = jnp.minimum(jnp.minimum(y0, y1), y2)
    xmax = jnp.maximum(jnp.maximum(x0, x1), x2)
    xmin = jnp.minimum(jnp.minimum(x0, x1), x2)
    zmax = jnp.maximum(jnp.maximum(z0, z1), z2)

    # face pixel-row bbox (conservative +-1 row); larger NDC y -> smaller row
    row_lo = jnp.floor((1.0 - ymax) * H / 2.0 - 0.5).astype(jnp.int32) - 1
    row_hi = jnp.ceil((1.0 - ymin) * H / 2.0 - 0.5).astype(jnp.int32) + 1

    # cull faces that can never render (keeps correctness: culling is conservative)
    x_lo_pix, x_hi_pix = -1.0 + 1.0 / W, 1.0 - 1.0 / W
    y_lo_pix, y_hi_pix = -1.0 + 1.0 / H, 1.0 - 1.0 / H
    on_image = ((xmax >= x_lo_pix) & (xmin <= x_hi_pix) &
                (ymax >= y_lo_pix) & (ymin <= y_hi_pix))
    face_ok = on_image & (zmax >= 0.0) & jnp.logical_not(degen)

    row_lo = jnp.clip(row_lo, 0, H - 1)
    row_hi = jnp.clip(row_hi, 0, H - 1)

    # pixel-row range covered by each tile (tiles are contiguous flattened pixels)
    tile_ids = jnp.arange(num_tiles, dtype=jnp.int32)
    tstart = tile_ids * (PT * 128)
    tend = jnp.minimum((tile_ids + 1) * (PT * 128) - 1, HW - 1)
    trow_lo = tstart // W
    trow_hi = tend // W

    overlap = (face_ok[:, None, :]
               & (row_lo[:, None, :] <= trow_hi[None, :, None])
               & (row_hi[:, None, :] >= trow_lo[None, :, None]))   # (N, T, F)

    counts = overlap.sum(axis=-1).astype(jnp.int32).reshape(N * num_tiles)
    # stable argsort of (not overlap) puts binned face indices first, in order
    face_ids = jnp.argsort(jnp.where(overlap, 0, 1).astype(jnp.int32),
                           axis=-1, stable=True).astype(jnp.int32)
    face_ids = face_ids.reshape(N * num_tiles, F)

    # ---- pallas call ---------------------------------------------------------
    kernel = functools.partial(_rasterize_kernel, F=F, D=D, num_tiles=num_tiles)
    out = pl.pallas_call(
        kernel,
        out_shape=jax.ShapeDtypeStruct((N, D + 1, rows, 128), jnp.float32),
        grid_spec=pltpu.PrefetchScalarGridSpec(
            num_scalar_prefetch=2,
            grid=(N, num_tiles),
            in_specs=[
                pl.BlockSpec(memory_space=pltpu.MemorySpace.SMEM),
                pl.BlockSpec((PT, 128), lambda n, t, cnt, fid: (t, 0)),
                pl.BlockSpec((PT, 128), lambda n, t, cnt, fid: (t, 0)),
            ],
            out_specs=pl.BlockSpec((1, D + 1, PT, 128),
                                   lambda n, t, cnt, fid: (n, 0, t, 0)),
        ),
        compiler_params=pltpu.CompilerParams(
            dimension_semantics=("parallel", "parallel")),
    )(counts, face_ids, coef, xg, yg)

    out = out.reshape(N, D + 1, HWp)[:, :, :HW].reshape(N, D + 1, H, W)
    return out


if __name__ == "__main__":
    key = jax.random.PRNGKey(0)
    k1, k2, k3, k4 = jax.random.split(key, 4)
    N, V, F, D = 2, 12, 8, 4
    image_size = 16

    xy = jax.random.uniform(k1, (N, V, 2), jnp.float32, minval=-1.0, maxval=1.0)
    z = jax.random.uniform(k2, (N, V, 1), jnp.float32, minval=0.1, maxval=2.0)
    vertices = jnp.concatenate([xy, z], axis=-1)          # (N, V, 3)
    faces = jax.random.randint(k3, (N, F, 3), 0, V, dtype=jnp.int32)
    attributes = jax.random.normal(k4, (N, F, 3, D), jnp.float32)

    out = pytorch3d_rasterizer_forward(vertices, faces, attributes, image_size)
    out = jax.block_until_ready(out)
    assert out.shape == (N, D + 1, image_size, image_size)
    assert bool(jnp.all(jnp.isfinite(out)))
    print("KERNEL_OK")
</pallas_src>

<mosaic_0001>
module attributes {stable_mosaic.version = 11 : i64} {
  func.func @_rasterize_kernel(%arg0: i32, %arg1: i32, %arg2: memref<2xi32, #tpu.memory_space<smem>>, %arg3: memref<2x8xi32, #tpu.memory_space<smem>>, %arg4: memref<21x16xf32, #tpu.memory_space<smem>>, %arg5: memref<2x128xf32, #tpu.memory_space<vmem>>, %arg6: memref<2x128xf32, #tpu.memory_space<vmem>>, %arg7: memref<1x5x2x128xf32, #tpu.memory_space<vmem>>) attributes {dimension_semantics = [#tpu.dimension_semantics<parallel>, #tpu.dimension_semantics<parallel>], iteration_bounds = array<i64: 2, 1>, scalar_prefetch = 2 : i64, scratch_operands = 0 : i64, tpu.core_type = #tpu.core_type<tc>, window_params = [{transform_indices = @transform_0, window_bounds = array<i64: 21, 16>}, {transform_indices = @transform_1, window_bounds = array<i64: 2, 128>}, {transform_indices = @transform_2, window_bounds = array<i64: 2, 128>}, {transform_indices = @transform_3, window_bounds = array<i64: 1, 5, 2, 128>}]} {
    %c8_i32 = arith.constant 8 : i32
    %0 = arith.muli %arg0, %c8_i32 : i32
    %c1_i32 = arith.constant 1 : i32
    %1 = arith.muli %arg0, %c1_i32 : i32
    %2 = arith.addi %1, %arg1 : i32
    %3 = arith.index_cast %2 : i32 to index
    %4 = memref.load %arg2[%3] : memref<2xi32, #tpu.memory_space<smem>>
    %c0 = arith.constant 0 : index
    %c0_0 = arith.constant 0 : index
    %5 = vector.load %arg5[%c0, %c0_0] : memref<2x128xf32, #tpu.memory_space<vmem>>, vector<2x128xf32>
    %c0_1 = arith.constant 0 : index
    %c0_2 = arith.constant 0 : index
    %6 = vector.load %arg6[%c0_1, %c0_2] : memref<2x128xf32, #tpu.memory_space<vmem>>, vector<2x128xf32>
    %cst = arith.constant 1.000000e+10 : f32
    %7 = vector.broadcast %cst : f32 to vector<2x128xf32>
    %cst_3 = arith.constant 0.000000e+00 : f32
    %8 = vector.broadcast %cst_3 : f32 to vector<2x128xf32>
    %cst_4 = arith.constant 0.000000e+00 : f32
    %9 = vector.broadcast %cst_4 : f32 to vector<2x128xf32>
    %cst_5 = arith.constant 0.000000e+00 : f32
    %10 = vector.broadcast %cst_5 : f32 to vector<2x128xf32>
    %cst_6 = arith.constant 0.000000e+00 : f32
    %11 = vector.broadcast %cst_6 : f32 to vector<2x128xf32>
    %c0_i32 = arith.constant 0 : i32
    %12 = arith.subi %4, %c0_i32 : i32
    %13 = arith.addi %c0_i32, %12 : i32
    %c1_i32_7 = arith.constant 1 : i32
    %14:5 = scf.for %arg8 = %c0_i32 to %13 step %c1_i32_7 iter_args(%arg9 = %7, %arg10 = %8, %arg11 = %9, %arg12 = %10, %arg13 = %11) -> (vector<2x128xf32>, vector<2x128xf32>, vector<2x128xf32>, vector<2x128xf32>, vector<2x128xf32>)  : i32 {
      %34 = arith.index_cast %2 : i32 to index
      %35 = arith.index_cast %arg8 : i32 to index
      %36 = memref.load %arg3[%34, %35] : memref<2x8xi32, #tpu.memory_space<smem>>
      %37 = arith.addi %0, %36 : i32
      %c0_25 = arith.constant 0 : index
      %38 = arith.index_cast %37 : i32 to index
      %39 = memref.load %arg4[%c0_25, %38] : memref<21x16xf32, #tpu.memory_space<smem>>
      %c1_26 = arith.constant 1 : index
      %40 = arith.index_cast %37 : i32 to index
      %41 = memref.load %arg4[%c1_26, %40] : memref<21x16xf32, #tpu.memory_space<smem>>
      %c2_27 = arith.constant 2 : index
      %42 = arith.index_cast %37 : i32 to index
      %43 = memref.load %arg4[%c2_27, %42] : memref<21x16xf32, #tpu.memory_space<smem>>
      %c3_28 = arith.constant 3 : index
      %44 = arith.index_cast %37 : i32 to index
      %45 = memref.load %arg4[%c3_28, %44] : memref<21x16xf32, #tpu.memory_space<smem>>
      %c4_29 = arith.constant 4 : index
      %46 = arith.index_cast %37 : i32 to index
      %47 = memref.load %arg4[%c4_29, %46] : memref<21x16xf32, #tpu.memory_space<smem>>
      %c5 = arith.constant 5 : index
      %48 = arith.index_cast %37 : i32 to index
      %49 = memref.load %arg4[%c5, %48] : memref<21x16xf32, #tpu.memory_space<smem>>
      %c6 = arith.constant 6 : index
      %50 = arith.index_cast %37 : i32 to index
      %51 = memref.load %arg4[%c6, %50] : memref<21x16xf32, #tpu.memory_space<smem>>
      %c7 = arith.constant 7 : index
      %52 = arith.index_cast %37 : i32 to index
      %53 = memref.load %arg4[%c7, %52] : memref<21x16xf32, #tpu.memory_space<smem>>
      %c8 = arith.constant 8 : index
      %54 = arith.index_cast %37 : i32 to index
      %55 = memref.load %arg4[%c8, %54] : memref<21x16xf32, #tpu.memory_space<smem>>
      %56 = vector.broadcast %39 : f32 to vector<2x128xf32>
      %57 = arith.mulf %56, %5 : vector<2x128xf32>
      %58 = vector.broadcast %41 : f32 to vector<2x128xf32>
      %59 = arith.mulf %58, %6 : vector<2x128xf32>
      %60 = arith.addf %57, %59 : vector<2x128xf32>
      %61 = vector.broadcast %43 : f32 to vector<2x128xf32>
      %62 = arith.addf %60, %61 : vector<2x128xf32>
      %63 = vector.broadcast %45 : f32 to vector<2x128xf32>
      %64 = arith.mulf %63, %5 : vector<2x128xf32>
      %65 = vector.broadcast %47 : f32 to vector<2x128xf32>
      %66 = arith.mulf %65, %6 : vector<2x128xf32>
      %67 = arith.addf %64, %66 : vector<2x128xf32>
      %68 = vector.broadcast %49 : f32 to vector<2x128xf32>
      %69 = arith.addf %67, %68 : vector<2x128xf32>
      %cst_30 = arith.constant 1.000000e+00 : f32
      %70 = vector.broadcast %cst_30 : f32 to vector<2x128xf32>
      %71 = arith.subf %70, %62 : vector<2x128xf32>
      %72 = arith.subf %71, %69 : vector<2x128xf32>
      %73 = vector.broadcast %51 : f32 to vector<2x128xf32>
      %74 = arith.mulf %73, %5 : vector<2x128xf32>
      %75 = vector.broadcast %53 : f32 to vector<2x128xf32>
      %76 = arith.mulf %75, %6 : vector<2x128xf32>
      %77 = arith.addf %74, %76 : vector<2x128xf32>
      %78 = vector.broadcast %55 : f32 to vector<2x128xf32>
      %79 = arith.addf %77, %78 : vector<2x128xf32>
      %80 = arith.minimumf %69, %72 : vector<2x128xf32>
      %81 = arith.minimumf %62, %80 : vector<2x128xf32>
      %cst_31 = arith.constant 0.000000e+00 : f32
      %82 = vector.broadcast %cst_31 : f32 to vector<2x128xf32>
      %83 = arith.cmpf ogt, %81, %82 : vector<2x128xf32>
      %cst_32 = arith.constant 0.000000e+00 : f32
      %84 = vector.broadcast %cst_32 : f32 to vector<2x128xf32>
      %85 = arith.cmpf oge, %79, %84 : vector<2x128xf32>
      %86 = arith.andi %83, %85 : vector<2x128xi1>
      %87 = arith.cmpf olt, %79, %arg9 : vector<2x128xf32>
      %88 = arith.andi %86, %87 : vector<2x128xi1>
      %89 = arith.select %88, %79, %arg9 : vector<2x128xi1>, vector<2x128xf32>
      %c9 = arith.constant 9 : index
      %90 = arith.index_cast %37 : i32 to index
      %91 = memref.load %arg4[%c9, %90] : memref<21x16xf32, #tpu.memory_space<smem>>
      %c10 = arith.constant 10 : index
      %92 = arith.index_cast %37 : i32 to index
      %93 = memref.load %arg4[%c10, %92] : memref<21x16xf32, #tpu.memory_space<smem>>
      %c11 = arith.constant 11 : index
      %94 = arith.index_cast %37 : i32 to index
      %95 = memref.load %arg4[%c11, %94] : memref<21x16xf32, #tpu.memory_space<smem>>
      %96 = vector.broadcast %91 : f32 to vector<2x128xf32>
      %97 = arith.mulf %96, %5 : vector<2x128xf32>
      %98 = vector.broadcast %93 : f32 to vector<2x128xf32>
      %99 = arith.mulf %98, %6 : vector<2x128xf32>
      %100 = arith.addf %97, %99 : vector<2x128xf32>
      %101 = vector.broadcast %95 : f32 to vector<2x128xf32>
      %102 = arith.addf %100, %101 : vector<2x128xf32>
      %103 = arith.select %88, %102, %arg10 : vector<2x128xi1>, vector<2x128xf32>
      %c12 = arith.constant 12 : index
      %104 = arith.index_cast %37 : i32 to index
      %105 = memref.load %arg4[%c12, %104] : memref<21x16xf32, #tpu.memory_space<smem>>
      %c13 = arith.constant 13 : index
      %106 = arith.index_cast %37 : i32 to index
      %107 = memref.load %arg4[%c13, %106] : memref<21x16xf32, #tpu.memory_space<smem>>
      %c14 = arith.constant 14 : index
      %108 = arith.index_cast %37 : i32 to index
      %109 = memref.load %arg4[%c14, %108] : memref<21x16xf32, #tpu.memory_space<smem>>
      %110 = vector.broadcast %105 : f32 to vector<2x128xf32>
      %111 = arith.mulf %110, %5 : vector<2x128xf32>
      %112 = vector.broadcast %107 : f32 to vector<2x128xf32>
      %113 = arith.mulf %112, %6 : vector<2x128xf32>
      %114 = arith.addf %111, %113 : vector<2x128xf32>
      %115 = vector.broadcast %109 : f32 to vector<2x128xf32>
      %116 = arith.addf %114, %115 : vector<2x128xf32>
      %117 = arith.select %88, %116, %arg11 : vector<2x128xi1>, vector<2x128xf32>
      %c15 = arith.constant 15 : index
      %118 = arith.index_cast %37 : i32 to index
      %119 = memref.load %arg4[%c15, %118] : memref<21x16xf32, #tpu.memory_space<smem>>
      %c16 = arith.constant 16 : index
      %120 = arith.index_cast %37 : i32 to index
      %121 = memref.load %arg4[%c16, %120] : memref<21x16xf32, #tpu.memory_space<smem>>
      %c17 = arith.constant 17 : index
      %122 = arith.index_cast %37 : i32 to index
      %123 = memref.load %arg4[%c17, %122] : memref<21x16xf32, #tpu.memory_space<smem>>
      %124 = vector.broadcast %119 : f32 to vector<2x128xf32>
      %125 = arith.mulf %124, %5 : vector<2x128xf32>
      %126 = vector.broadcast %121 : f32 to vector<2x128xf32>
      %127 = arith.mulf %126, %6 : vector<2x128xf32>
      %128 = arith.addf %125, %127 : vector<2x128xf32>
      %129 = vector.broadcast %123 : f32 to vector<2x128xf32>
      %130 = arith.addf %128, %129 : vector<2x128xf32>
      %131 = arith.select %88, %130, %arg12 : vector<2x128xi1>, vector<2x128xf32>
      %c18 = arith.constant 18 : index
      %132 = arith.index_cast %37 : i32 to index
      %133 = memref.load %arg4[%c18, %132] : memref<21x16xf32, #tpu.memory_space<smem>>
      %c19 = arith.constant 19 : index
      %134 = arith.index_cast %37 : i32 to index
      %135 = memref.load %arg4[%c19, %134] : memref<21x16xf32, #tpu.memory_space<smem>>
      %c20 = arith.constant 20 : index
      %136 = arith.index_cast %37 : i32 to index
      %137 = memref.load %arg4[%c20, %136] : memref<21x16xf32, #tpu.memory_space<smem>>
      %138 = vector.broadcast %133 : f32 to vector<2x128xf32>
      %139 = arith.mulf %138, %5 : vector<2x128xf32>
      %140 = vector.broadcast %135 : f32 to vector<2x128xf32>
      %141 = arith.mulf %140, %6 : vector<2x128xf32>
      %142 = arith.addf %139, %141 : vector<2x128xf32>
      %143 = vector.broadcast %137 : f32 to vector<2x128xf32>
      %144 = arith.addf %142, %143 : vector<2x128xf32>
      %145 = arith.select %88, %144, %arg13 : vector<2x128xi1>, vector<2x128xf32>
      scf.yield %89, %103, %117, %131, %145 : vector<2x128xf32>, vector<2x128xf32>, vector<2x128xf32>, vector<2x128xf32>, vector<2x128xf32>
    }
    %cst_8 = arith.constant 1.000000e+10 : f32
    %15 = vector.broadcast %cst_8 : f32 to vector<2x128xf32>
    %16 = arith.cmpf olt, %14#0, %15 : vector<2x128xf32>
    %17 = arith.extui %16 : vector<2x128xi1> to vector<2x128xi32>
    %18 = arith.sitofp %17 : vector<2x128xi32> to vector<2x128xf32>
    %c0_9 = arith.constant 0 : index
    %c0_10 = arith.constant 0 : index
    %c0_11 = arith.constant 0 : index
    %c0_12 = arith.constant 0 : index
    %19 = vector.load %arg7[%c0_9, %c0_10, %c0_11, %c0_12] : memref<1x5x2x128xf32, #tpu.memory_space<vmem>>, vector<1x1x2x128xf32>
    %20 = vector.shape_cast %19 : vector<1x1x2x128xf32> to vector<2x128xf32>
    %21 = vector.shape_cast %14#1 : vector<2x128xf32> to vector<1x1x2x128xf32>
    tpu.vector_store %arg7[%c0_9, %c0_10, %c0_11, %c0_12], %21 {strides = array<i32>} : memref<1x5x2x128xf32, #tpu.memory_space<vmem>>, vector<1x1x2x128xf32>,
    %c0_13 = arith.constant 0 : index
    %c1 = arith.constant 1 : index
    %c0_14 = arith.constant 0 : index
    %c0_15 = arith.constant 0 : index
    %22 = vector.load %arg7[%c0_13, %c1, %c0_14, %c0_15] : memref<1x5x2x128xf32, #tpu.memory_space<vmem>>, vector<1x1x2x128xf32>
    %23 = vector.shape_cast %22 : vector<1x1x2x128xf32> to vector<2x128xf32>
    %24 = vector.shape_cast %14#2 : vector<2x128xf32> to vector<1x1x2x128xf32>
    tpu.vector_store %arg7[%c0_13, %c1, %c0_14, %c0_15], %24 {strides = array<i32>} : memref<1x5x2x128xf32, #tpu.memory_space<vmem>>, vector<1x1x2x128xf32>,
    %c0_16 = arith.constant 0 : index
    %c2 = arith.constant 2 : index
    %c0_17 = arith.constant 0 : index
    %c0_18 = arith.constant 0 : index
    %25 = vector.load %arg7[%c0_16, %c2, %c0_17, %c0_18] : memref<1x5x2x128xf32, #tpu.memory_space<vmem>>, vector<1x1x2x128xf32>
    %26 = vector.shape_cast %25 : vector<1x1x2x128xf32> to vector<2x128xf32>
    %27 = vector.shape_cast %14#3 : vector<2x128xf32> to vector<1x1x2x128xf32>
    tpu.vector_store %arg7[%c0_16, %c2, %c0_17, %c0_18], %27 {strides = array<i32>} : memref<1x5x2x128xf32, #tpu.memory_space<vmem>>, vector<1x1x2x128xf32>,
    %c0_19 = arith.constant 0 : index
    %c3 = arith.constant 3 : index
    %c0_20 = arith.constant 0 : index
    %c0_21 = arith.constant 0 : index
    %28 = vector.load %arg7[%c0_19, %c3, %c0_20, %c0_21] : memref<1x5x2x128xf32, #tpu.memory_space<vmem>>, vector<1x1x2x128xf32>
    %29 = vector.shape_cast %28 : vector<1x1x2x128xf32> to vector<2x128xf32>
    %30 = vector.shape_cast %14#4 : vector<2x128xf32> to vector<1x1x2x128xf32>
    tpu.vector_store %arg7[%c0_19, %c3, %c0_20, %c0_21], %30 {strides = array<i32>} : memref<1x5x2x128xf32, #tpu.memory_space<vmem>>, vector<1x1x2x128xf32>,
    %c0_22 = arith.constant 0 : index
    %c4 = arith.constant 4 : index
    %c0_23 = arith.constant 0 : index
    %c0_24 = arith.constant 0 : index
    %31 = vector.load %arg7[%c0_22, %c4, %c0_23, %c0_24] : memref<1x5x2x128xf32, #tpu.memory_space<vmem>>, vector<1x1x2x128xf32>
    %32 = vector.shape_cast %31 : vector<1x1x2x128xf32> to vector<2x128xf32>
    %33 = vector.shape_cast %18 : vector<2x128xf32> to vector<1x1x2x128xf32>
    tpu.vector_store %arg7[%c0_22, %c4, %c0_23, %c0_24], %33 {strides = array<i32>} : memref<1x5x2x128xf32, #tpu.memory_space<vmem>>, vector<1x1x2x128xf32>,
    return
  }
  func.func @transform_0(%arg0: i32, %arg1: i32, %arg2: memref<2xi32, #tpu.memory_space<smem>>, %arg3: memref<2x8xi32, #tpu.memory_space<smem>>) -> (i32, i32) {
    %c0_i32 = arith.constant 0 : i32
    %c0_i32_0 = arith.constant 0 : i32
    %c0_i32_1 = arith.constant 0 : i32
    return %c0_i32, %c0_i32_0 : i32, i32
  }
  func.func @transform_1(%arg0: i32, %arg1: i32, %arg2: memref<2xi32, #tpu.memory_space<smem>>, %arg3: memref<2x8xi32, #tpu.memory_space<smem>>) -> (i32, i32) {
    %c0_i32 = arith.constant 0 : i32
    %c0_i32_0 = arith.constant 0 : i32
    return %arg1, %c0_i32 : i32, i32
  }
  func.func @transform_2(%arg0: i32, %arg1: i32, %arg2: memref<2xi32, #tpu.memory_space<smem>>, %arg3: memref<2x8xi32, #tpu.memory_space<smem>>) -> (i32, i32) {
    %c0_i32 = arith.constant 0 : i32
    %c0_i32_0 = arith.constant 0 : i32
    return %arg1, %c0_i32 : i32, i32
  }
  func.func @transform_3(%arg0: i32, %arg1: i32, %arg2: memref<2xi32, #tpu.memory_space<smem>>, %arg3: memref<2x8xi32, #tpu.memory_space<smem>>) -> (i32, i32, i32, i32) {
    %c0_i32 = arith.constant 0 : i32
    %c0_i32_0 = arith.constant 0 : i32
    %c0_i32_1 = arith.constant 0 : i32
    return %arg0, %c0_i32, %arg1, %c0_i32_0 : i32, i32, i32, i32
  }
}

</mosaic_0001>

<llo_original>
// kernel: tpu_custom_call.1
$region0: #{tpu_custom_call.1}
  #allocation0 [shape = 'u32[]', space=smem, size = 0x4, offset = 0x4, fixed_abs, tag = 'smem constant byte address 0x4 - core index']
  #allocation1 [shape = 'u32[144,128]{1,0:T(1,128)}', space=vmem, size = 0x12000, scoped, tag = 'internal scratch']
  #allocation2 [shape = 's32[1]{0}', space=sflag, size = 0x4, scoped, tag = 'scoped memory for tpu_custom_call.1']
  #allocation3 [shape = 'u8[512]{0}', space=smem, size = 0x200, scoped, tag = 'prefetched SMEM operand 0']
  #allocation4 [shape = 'u8[1024]{0}', space=smem, size = 0x400, scoped, tag = 'prefetched SMEM operand 1']
  %s0 = inlined_call_operand.vmem [shape: s32[2], index: 0, kind: input, shape index: {}]
  %s1 = inlined_call_operand.vmem [shape: s32[2,8], index: 1, kind: input, shape index: {}]
  %s2 = inlined_call_operand.vmem [shape: f32[21,16], index: 2, kind: input, shape index: {}]
  %s3 = inlined_call_operand.vmem [shape: f32[2,128], index: 3, kind: input, shape index: {}]
  %s4 = inlined_call_operand.vmem [shape: f32[2,128], index: 4, kind: input, shape index: {}]
  %s5 = inlined_call_operand.hbm [shape: f32[2,5,2,128], index: 5, kind: output, shape index: {}]
  %s6 = sld [smem:[#allocation0]]
  $region56: #{tpu_custom_call.1} parent=0
    _
  %s8 = ssub.s32 1, %s6
  %s9 = scalar_select 0, %s8, %s6
  %s10 = sshll.u32 %s0, 4
  %s11 = int_to_ptr.vmem [resolvable:$true] %s10
  %13 = dma.vmem_to_smem %s11, 16, [#allocation3], [#allocation2]
  %s14 = sshll.u32 %s1, 4
  %s15 = int_to_ptr.vmem [resolvable:$true] %s14
  %17 = dma.vmem_to_smem %s15, 32, [#allocation4], [#allocation2]
  %18 = dma.done [#allocation2], 48
  %19 = sfence
  $region1: #{tpu_custom_call.1} parent=0
    #allocation5 [shape = 'u8[12288]{0}', space=smem, size = 0x3000, scoped, tag = 'input window, operand 2, single buffered']
    #allocation6 [shape = 's32[2]{0}', space=sflag, size = 0x8, scoped, tag = 'scoped memory for tpu_custom_call.1']
    #allocation7 [shape = 's32[2]{0}', space=sflag, size = 0x8, scoped, tag = 'scoped memory for tpu_custom_call.1']
    #allocation8 [shape = 'u8[10240]{0}', space=vmem, size = 0x2800, scoped, tag = 'output window, operand 0']
    %20 = vsyncpa [#allocation7], 0
    %21 = vsyncpa [#allocation6], 0
    %s22 = scalar_lea.sflag [#allocation6], 1
    %23 = vsyncpa %s22, 0
    loop: start=0, step=1, limit=4
    $region2: #{tpu_custom_call.1} parent=1 // loop_pre_header
      _
    $region3: #{tpu_custom_call.1} parent=1 // loop_header
      %s25 = sphi 0, %s29
      %p26 = scmp.ge.s32.totalorder %s25, 4
      %s32 = sphi 0, %s44
      %s33 = sphi 0, %s40
      %s34 = sphi 0, %s32
      %s35 = sphi 0, %s33
      %s36 = sphi 0, %s34
      %s37 = sphi 0, %s35
      %s45 = sphi 0, %s45
      %s47 = sphi 0, %s45
      %s48 = sphi 0, %s47
      %s62 = sphi 0, %s48
      %s68 = sphi 0, %s70
      %s71 = sphi 0, %s68
      %s72 = sphi 0, %s71
      %s88 = sphi 0, %s72
      %s94 = sphi 0, %s96
      %s97 = sphi 0, %s94
      %s98 = sphi 0, %s97
      %s114 = sphi 0, %s98
      %s122 = sphi 0, %s124
      %s125 = sphi 0, %s122
      %s126 = sphi 0, %s125
      %s142 = sphi 0, %s126
    $region4: #{tpu_custom_call.1} parent=1 // loop_header_branch
      %28 = sbr.rel (%p26) target = $region8
    $region5: #{tpu_custom_call.1} parent=1 // loop_body
      %s30 = ssub.s32 %s25, 1
      %s31 = ssub.s32 %s25, 2
      %s38 = sadd.s32 1, %s33
      %p39 = scmp.ge.s32.totalorder %s38, 1
      %s40 = scalar_select %p39, 0, %s38
      %s41 = sadd.s32 1, %s32
      %s42 = scalar_select %p39, %s41, %s32
      %p43 = scmp.ge.s32.totalorder %s42, 2
      %s44 = scalar_select %p43, 0, %s42
      %s46 = sadd.s32 %s45, 1
      %p49 = scmp.eq.s32.totalorder %s25, 1
      %p50 = scmp.ne.s32.totalorder %s45, %s47
      %p51 = scmp.eq.s32.totalorder %s25, 0
      %p52 = por %p50, %p51
      %p53 = scmp.ne.s32.totalorder %s45, %s47
      %p54 = scmp.eq.s32.totalorder %s30, 1
      %p55 = por %p53, %p54
      %p56 = scmp.ne.s32.totalorder %s47, %s48
      %p57 = scmp.eq.s32.totalorder %s30, 0
      %p58 = por %p56, %p57
      %p59 = scmp.ne.s32.totalorder %s47, %s48
      %p60 = scmp.eq.s32.totalorder %s31, 1
      %p61 = por %p59, %p60
      %p63 = scmp.ne.s32.totalorder %s48, %s62
      %p64 = scmp.eq.s32.totalorder %s31, 0
      %p65 = por %p63, %p64
      %s66 = ssub.s32 %s33, %s40
      %p67 = scmp.eq.s32.totalorder %s66, 0
      %s69 = sadd.s32 %s68, 1
      %s70 = scalar_select %p67, %s68, %s69
      %p73 = pneg %p67
      %p74 = scmp.eq.s32.totalorder %s25, 1
      %p75 = por %p73, %p74
      %p76 = scmp.ne.s32.totalorder %s68, %s71
      %p77 = scmp.eq.s32.totalorder %s25, 0
      %p78 = por %p76, %p77
      %p79 = scmp.ne.s32.totalorder %s68, %s71
      %p80 = scmp.eq.s32.totalorder %s30, 1
      %p81 = por %p79, %p80
      %p82 = scmp.ne.s32.totalorder %s71, %s72
      %p83 = scmp.eq.s32.totalorder %s30, 0
      %p84 = por %p82, %p83
      %p85 = scmp.ne.s32.totalorder %s71, %s72
      %p86 = scmp.eq.s32.totalorder %s31, 1
      %p87 = por %p85, %p86
      %p89 = scmp.ne.s32.totalorder %s72, %s88
      %p90 = scmp.eq.s32.totalorder %s31, 0
      %p91 = por %p89, %p90
      %s92 = ssub.s32 %s33, %s40
      %p93 = scmp.eq.s32.totalorder %s92, 0
      %s95 = sadd.s32 %s94, 1
      %s96 = scalar_select %p93, %s94, %s95
      %p99 = pneg %p93
      %p100 = scmp.eq.s32.totalorder %s25, 1
      %p101 = por %p99, %p100
      %p102 = scmp.ne.s32.totalorder %s94, %s97
      %p103 = scmp.eq.s32.totalorder %s25, 0
      %p104 = por %p102, %p103
      %p105 = scmp.ne.s32.totalorder %s94, %s97
      %p106 = scmp.eq.s32.totalorder %s30, 1
      %p107 = por %p105, %p106
      %p108 = scmp.ne.s32.totalorder %s97, %s98
      %p109 = scmp.eq.s32.totalorder %s30, 0
      %p110 = por %p108, %p109
      %p111 = scmp.ne.s32.totalorder %s97, %s98
      %p112 = scmp.eq.s32.totalorder %s31, 1
      %p113 = por %p111, %p112
      %p115 = scmp.ne.s32.totalorder %s98, %s114
      %p116 = scmp.eq.s32.totalorder %s31, 0
      %p117 = por %p115, %p116
      %s118 = ssub.s32 %s32, %s44
      %s119 = ssub.s32 %s33, %s40
      %s120 = sor.u32 %s118, %s119
      %p121 = scmp.eq.s32.totalorder %s120, 0
      %s123 = sadd.s32 %s122, 1
      %s124 = scalar_select %p121, %s122, %s123
      %p127 = pneg %p121
      %p128 = scmp.eq.s32.totalorder %s25, 1
      %p129 = por %p127, %p128
      %p130 = scmp.ne.s32.totalorder %s122, %s125
      %p131 = scmp.eq.s32.totalorder %s25, 0
      %p132 = por %p130, %p131
      %p133 = scmp.ne.s32.totalorder %s122, %s125
      %p134 = scmp.eq.s32.totalorder %s30, 1
      %p135 = por %p133, %p134
      %p136 = scmp.ne.s32.totalorder %s125, %s126
      %p137 = scmp.eq.s32.totalorder %s30, 0
      %p138 = por %p136, %p137
      %p139 = scmp.ne.s32.totalorder %s125, %s126
      %p140 = scmp.eq.s32.totalorder %s31, 1
      %p141 = por %p139, %p140
      %p143 = scmp.ne.s32.totalorder %s126, %s142
      %p144 = scmp.eq.s32.totalorder %s31, 0
      %p145 = por %p143, %p144
      %p146 = scmp.le.s32.totalorder 1, %s25
      %p147 = scmp.lt.s32.totalorder %s25, 3
      %p148 = pnand %p146, %p147
      %p149 = pneg %p148
      // Predicated region
      $region9: #{tpu_custom_call.1} parent=5 // pred_check
        _
      $region10: #{tpu_custom_call.1} parent=5 // pred_check_branch
        %151 = sbr.rel (%p148) target = $region12
      $region11: #{tpu_custom_call.1} parent=5 // pred_region
        %s152 = ssub.s32 %s25, 1
        // Predicated region
        $region13: #{tpu_custom_call.1} parent=11 // pred_check
          %p153 = pneg %p58
        $region14: #{tpu_custom_call.1} parent=11 // pred_check_branch
          %155 = sbr.rel (%p153) target = $region16
        $region15: #{tpu_custom_call.1} parent=11 // pred_region
          %s157 = ssub.s32 384, 384
          %158 = vsyncadd [#allocation7], %s157
          %s159 = sshll.u32 %s2, 4
          %s160 = int_to_ptr.vmem [resolvable:$true] %s159
          %165 = dma.vmem_to_smem %s160, 384, [#allocation5], [#allocation7], 128, 128, 8
        $region16: #{tpu_custom_call.1} parent=11 // pred_fallthru
          _
        // Predicated region
        $region17: #{tpu_custom_call.1} parent=11 // pred_check
          %p166 = pneg %p84
        $region18: #{tpu_custom_call.1} parent=11 // pred_check_branch
          %168 = sbr.rel (%p166) target = $region20
        $region19: #{tpu_custom_call.1} parent=11 // pred_region
          %p169 = scmp.lt.s32.totalorder %s35, 0
          %s170 = scalar_select %p169, %s35, 0
          %s171 = smul.addr %s170, 2
          %s172 = scalar_lea.vmem %s3, %s171
        $region20: #{tpu_custom_call.1} parent=11 // pred_fallthru
          _
        // Predicated region
        $region21: #{tpu_custom_call.1} parent=11 // pred_check
          %p173 = pneg %p110
        $region22: #{tpu_custom_call.1} parent=11 // pred_check_branch
          %175 = sbr.rel (%p173) target = $region24
        $region23: #{tpu_custom_call.1} parent=11 // pred_region
          %p176 = scmp.lt.s32.totalorder %s35, 0
          %s177 = scalar_select %p176, %s35, 0
          %s178 = smul.addr %s177, 2
          %s179 = scalar_lea.vmem %s4, %s178
        $region24: #{tpu_custom_call.1} parent=11 // pred_fallthru
          _
      $region12: #{tpu_custom_call.1} parent=5 // pred_fallthru
        _
      %p180 = scmp.lt.s32.totalorder %s25, 2
      // Predicated region
      $region25: #{tpu_custom_call.1} parent=5 // pred_check
        %p181 = pneg %p180
      $region26: #{tpu_custom_call.1} parent=5 // pred_check_branch
        %183 = sbr.rel (%p181) target = $region28
      $region27: #{tpu_custom_call.1} parent=5 // pred_region
        _
      $region28: #{tpu_custom_call.1} parent=5 // pred_fallthru
        _
      %p184 = scmp.le.s32.totalorder 1, %s25
      %p185 = scmp.lt.s32.totalorder %s25, 3
      %p186 = pnand %p184, %p185
      %p187 = pneg %p186
      // Predicated region
      $region29: #{tpu_custom_call.1} parent=5 // pred_check
        _
      $region30: #{tpu_custom_call.1} parent=5 // pred_check_branch
        %189 = sbr.rel (%p186) target = $region32
      $region31: #{tpu_custom_call.1} parent=5 // pred_region
        %s190 = ssub.s32 %s25, 1
        // Predicated region
        $region33: #{tpu_custom_call.1} parent=31 // pred_check
          %p191 = pneg %p58
        $region34: #{tpu_custom_call.1} parent=31 // pred_check_branch
          %193 = sbr.rel (%p191) target = $region36
        $region35: #{tpu_custom_call.1} parent=31 // pred_region
          %194 = dma.done [#allocation7], 384
        $region36: #{tpu_custom_call.1} parent=31 // pred_fallthru
          _
        %195 = sfence
        %p196 = pneg %p58
        %p197 = pneg %p55
        %p198 = scmp.lt.s32.totalorder %s35, 0
        %s199 = scalar_select %p198, %s35, 0
        %s200 = smul.addr %s199, 2
        %s201 = scalar_lea.vmem %s3, %s200
        %p202 = pneg %p84
        %p203 = pneg %p81
        %p204 = scmp.lt.s32.totalorder %s35, 0
        %s205 = scalar_select %p204, %s35, 0
        %s206 = smul.addr %s205, 2
        %s207 = scalar_lea.vmem %s4, %s206
        %p208 = pneg %p110
        %p209 = pneg %p107
        %p210 = pneg %p138
        %p211 = pneg %p135
        %s212 = sand.u32 %s125, 1
        %s213 = scalar_lea.sflag [#allocation6], %s212
        %s214 = sand.u32 %s125, 1
        %s215 = smul.addr %s214, 10
        %s216 = scalar_lea.vmem [#allocation8], %s215
        %p217 = scmp.lt.s32.totalorder %s35, 0
        %s218 = scalar_select %p217, %s35, 0
        %s219 = smul.addr %s218, 2
        %s220 = scalar_lea.vmem %s3, %s219
        %p221 = scmp.lt.s32.totalorder %s35, 0
        %s222 = scalar_select %p221, %s35, 0
        %s223 = smul.addr %s222, 2
        %s224 = scalar_lea.vmem %s4, %s223
        %s225 = smul.u32 %s34, 8
        %s226 = sadd.s32 %s34, %s35
        %s227 = sld [smem:[#allocation3 + %s226]]
        %v228 = vld [vmem:[%s220] sm:$0x3]
        %v229 = vld [vmem:[%s224] sm:$0x3]
        // While loop
        $region37: #{tpu_custom_call.1} parent=31 // loop_pre_header
          _
        $region38: #{tpu_custom_call.1} parent=31 // loop_header
          %s231 = sphi 0, %s233
          %p232 = scmp.ge.s32.totalorder %s231, %s227
          %v236 = vphi 1e+10, %v317
          %v237 = vphi 0.0, %v337
          %v238 = vphi 0.0, %v357
          %v239 = vphi 0.0, %v377
          %v240 = vphi 0.0, %v397
        $region39: #{tpu_custom_call.1} parent=31 // loop_header_branch
          %235 = sbr.rel (%p232) target = $region43
        $region40: #{tpu_custom_call.1} parent=31 // loop_body
          %s241 = sshra.s32 %s231, 7
          %s242 = sand.u32 %s231, 127
          %s243 = sadd.s32 %s241, %s226
          %s244 = smul.u32 %s243, 128
          %s245 = sshra.s32 %s231, 7
          %s246 = sand.u32 %s231, 127
          %s247 = sadd.s32 %s244, %s246
          %s248 = sld [smem:[#allocation4 + %s247]]
          %s249 = sadd.s32 %s225, %s248
          %s250 = sld [smem:[#allocation5 + %s249]]
          %s251 = sshra.s32 %s249, 7
          %s252 = sand.u32 %s249, 127
          %s253 = sadd.s32 %s251, 1
          %s254 = smul.u32 %s253, 128
          %s255 = sshra.s32 %s249, 7
          %s256 = sand.u32 %s249, 127
          %s257 = sadd.s32 %s254, %s256
          %s258 = sld [smem:[#allocation5 + %s257]]
          %s259 = sadd.s32 %s251, 2
          %s260 = smul.u32 %s259, 128
          %s261 = sadd.s32 %s260, %s256
          %s262 = sld [smem:[#allocation5 + %s261]]
          %s263 = sadd.s32 %s251, 3
          %s264 = smul.u32 %s263, 128
          %s265 = sadd.s32 %s264, %s256
          %s266 = sld [smem:[#allocation5 + %s265]]
          %s267 = sadd.s32 %s251, 4
          %s268 = smul.u32 %s267, 128
          %s269 = sadd.s32 %s268, %s256
          %s270 = sld [smem:[#allocation5 + %s269]]
          %s271 = sadd.s32 %s251, 5
          %s272 = smul.u32 %s271, 128
          %s273 = sadd.s32 %s272, %s256
          %s274 = sld [smem:[#allocation5 + %s273]]
          %s275 = sadd.s32 %s251, 6
          %s276 = smul.u32 %s275, 128
          %s277 = sadd.s32 %s276, %s256
          %s278 = sld [smem:[#allocation5 + %s277]]
          %s279 = sadd.s32 %s251, 7
          %s280 = smul.u32 %s279, 128
          %s281 = sadd.s32 %s280, %s256
          %s282 = sld [smem:[#allocation5 + %s281]]
          %s283 = sadd.s32 %s251, 8
          %s284 = smul.u32 %s283, 128
          %s285 = sadd.s32 %s284, %s256
          %s286 = sld [smem:[#allocation5 + %s285]]
          %v287 = vstv %s250
          %v288 = vmul.f32 %v287, %v228
          %v289 = vstv %s258
          %v290 = vmul.f32 %v289, %v229
          %v291 = vadd.f32 %v288, %v290
          %v292 = vstv %s262
          %v293 = vadd.f32 %v291, %v292
          %v294 = vstv %s266
          %v295 = vmul.f32 %v294, %v228
          %v296 = vstv %s270
          %v297 = vmul.f32 %v296, %v229
          %v298 = vadd.f32 %v295, %v297
          %v299 = vstv %s274
          %v300 = vadd.f32 %v298, %v299
          %v301 = vsub.f32 1.0, %v293
          %v302 = vsub.f32 %v301, %v300
          %v303 = vstv %s278
          %v304 = vmul.f32 %v303, %v228
          %v305 = vstv %s282
          %v306 = vmul.f32 %v305, %v229
          %v307 = vadd.f32 %v304, %v306
          %v308 = vstv %s286
          %v309 = vadd.f32 %v307, %v308
          %v310 = vmin.f32 %v300, %v302
          %v311 = vmin.f32 %v293, %v310
          %vm312 = vcmp.gt.f32.partialorder %v311, 0.0
          %vm313 = vcmp.ge.f32.partialorder %v309, 0.0
          %vm314 = vmand %vm312, %vm313
          %vm315 = vcmp.lt.f32.partialorder %v309, %v236
          %vm316 = vmand %vm314, %vm315
          %v317 = vsel %vm316, %v309, %v236
          %s318 = sadd.s32 %s251, 9
          %s319 = smul.u32 %s318, 128
          %s320 = sadd.s32 %s319, %s256
          %s321 = sld [smem:[#allocation5 + %s320]]
          %s322 = sadd.s32 %s251, 10
          %s323 = smul.u32 %s322, 128
          %s324 = sadd.s32 %s323, %s256
          %s325 = sld [smem:[#allocation5 + %s324]]
          %s326 = sadd.s32 %s251, 11
          %s327 = smul.u32 %s326, 128
          %s328 = sadd.s32 %s327, %s256
          %s329 = sld [smem:[#allocation5 + %s328]]
          %v330 = vstv %s321
          %v331 = vmul.f32 %v330, %v228
          %v332 = vstv %s325
          %v333 = vmul.f32 %v332, %v229
          %v334 = vadd.f32 %v331, %v333
          %v335 = vstv %s329
          %v336 = vadd.f32 %v334, %v335
          %v337 = vsel %vm316, %v336, %v237
          %s338 = sadd.s32 %s251, 12
          %s339 = smul.u32 %s338, 128
          %s340 = sadd.s32 %s339, %s256
          %s341 = sld [smem:[#allocation5 + %s340]]
          %s342 = sadd.s32 %s251, 13
          %s343 = smul.u32 %s342, 128
          %s344 = sadd.s32 %s343, %s256
          %s345 = sld [smem:[#allocation5 + %s344]]
          %s346 = sadd.s32 %s251, 14
          %s347 = smul.u32 %s346, 128
          %s348 = sadd.s32 %s347, %s256
          %s349 = sld [smem:[#allocation5 + %s348]]
          %v350 = vstv %s341
          %v351 = vmul.f32 %v350, %v228
          %v352 = vstv %s345
          %v353 = vmul.f32 %v352, %v229
          %v354 = vadd.f32 %v351, %v353
          %v355 = vstv %s349
          %v356 = vadd.f32 %v354, %v355
          %v357 = vsel %vm316, %v356, %v238
          %s358 = sadd.s32 %s251, 15
          %s359 = smul.u32 %s358, 128
          %s360 = sadd.s32 %s359, %s256
          %s361 = sld [smem:[#allocation5 + %s360]]
          %s362 = sadd.s32 %s251, 16
          %s363 = smul.u32 %s362, 128
          %s364 = sadd.s32 %s363, %s256
          %s365 = sld [smem:[#allocation5 + %s364]]
          %s366 = sadd.s32 %s251, 17
          %s367 = smul.u32 %s366, 128
          %s368 = sadd.s32 %s367, %s256
          %s369 = sld [smem:[#allocation5 + %s368]]
          %v370 = vstv %s361
          %v371 = vmul.f32 %v370, %v228
          %v372 = vstv %s365
          %v373 = vmul.f32 %v372, %v229
          %v374 = vadd.f32 %v371, %v373
          %v375 = vstv %s369
          %v376 = vadd.f32 %v374, %v375
          %v377 = vsel %vm316, %v376, %v239
          %s378 = sadd.s32 %s251, 18
          %s379 = smul.u32 %s378, 128
          %s380 = sadd.s32 %s379, %s256
          %s381 = sld [smem:[#allocation5 + %s380]]
          %s382 = sadd.s32 %s251, 19
          %s383 = smul.u32 %s382, 128
          %s384 = sadd.s32 %s383, %s256
          %s385 = sld [smem:[#allocation5 + %s384]]
          %s386 = sadd.s32 %s251, 20
          %s387 = smul.u32 %s386, 128
          %s388 = sadd.s32 %s387, %s256
          %s389 = sld [smem:[#allocation5 + %s388]]
          %v390 = vstv %s381
          %v391 = vmul.f32 %v390, %v228
          %v392 = vstv %s385
          %v393 = vmul.f32 %v392, %v229
          %v394 = vadd.f32 %v391, %v393
          %v395 = vstv %s389
          %v396 = vadd.f32 %v394, %v395
          %v397 = vsel %vm316, %v396, %v240
        $region41: #{tpu_custom_call.1} parent=31 // loop_footer
          %s233 = sadd.s32 %s231, 1
        $region42: #{tpu_custom_call.1} parent=31 // loop_footer_branch
          %230 = sbr.rel target = $region38
        $region43: #{tpu_custom_call.1} parent=31 // loop_exit
          _
        %vm398 = vcmp.lt.f32.partialorder %v236, 1e+10
        %v399 = vsel %vm398, 1, 0
        %v400 = vcvt.s32.f32 %v399
        %401 = vst [vmem:[%s216] sm:$0x3] %v237
        %s402 = scalar_lea.vmem %s216, 2 [#allocation8]
        %403 = vst [vmem:[%s402] sm:$0x3] %v238
        %s404 = scalar_lea.vmem %s216, 4 [#allocation8]
        %405 = vst [vmem:[%s404] sm:$0x3] %v239
        %s406 = scalar_lea.vmem %s216, 6 [#allocation8]
        %407 = vst [vmem:[%s406] sm:$0x3] %v240
        %s408 = scalar_lea.vmem %s216, 8 [#allocation8]
        %409 = vst [vmem:[%s408] sm:$0x3] %v400
        %s410 = sand.u32 %s125, 1
        %s411 = scalar_lea.sflag [#allocation6], %s410
        %s412 = sand.u32 %s125, 1
        %s413 = smul.addr %s412, 10
        %s414 = scalar_lea.vmem [#allocation8], %s413
        // Predicated region
        $region44: #{tpu_custom_call.1} parent=31 // pred_check
          %p415 = pneg %p135
        $region45: #{tpu_custom_call.1} parent=31 // pred_check_branch
          %417 = sbr.rel (%p415) target = $region47
        $region46: #{tpu_custom_call.1} parent=31 // pred_region
          %s419 = ssub.s32 160, 160
          %420 = vsyncadd %s411, %s419
          %s421 = smul.addr %s34, 5
          %s422 = sadd.s32 %s35, %s421
          %s423 = smul.addr %s422, 32
          %s424 = scalar_lea.hbm %s5, %s423
          %s425 = sshll.u32 %s414, 4
          %s426 = int_to_ptr.vmem [resolvable:$true] %s425
          %431 = dma.vmem_to_hbm [thread:$0]  %s426, 160, %s424, %s411, 32, 32, 2
        $region47: #{tpu_custom_call.1} parent=31 // pred_fallthru
          _
      $region32: #{tpu_custom_call.1} parent=5 // pred_fallthru
        _
      %p432 = scmp.le.s32.totalorder 2, %s25
      // Predicated region
      $region48: #{tpu_custom_call.1} parent=5 // pred_check
        %p433 = pneg %p432
      $region49: #{tpu_custom_call.1} parent=5 // pred_check_branch
        %435 = sbr.rel (%p433) target = $region51
      $region50: #{tpu_custom_call.1} parent=5 // pred_region
        %s436 = ssub.s32 %s25, 2
        // Predicated region
        $region52: #{tpu_custom_call.1} parent=50 // pred_check
          %p437 = pneg %p141
        $region53: #{tpu_custom_call.1} parent=50 // pred_check_branch
          %439 = sbr.rel (%p437) target = $region55
        $region54: #{tpu_custom_call.1} parent=50 // pred_region
          %s440 = sand.u32 %s126, 1
          %s441 = scalar_lea.sflag [#allocation6], %s440
          %s442 = sand.u32 %s126, 1
          %s443 = smul.addr %s442, 10
          %s444 = scalar_lea.vmem [#allocation8], %s443
          %445 = dma.done %s441, 160
        $region55: #{tpu_custom_call.1} parent=50 // pred_fallthru
          _
      $region51: #{tpu_custom_call.1} parent=5 // pred_fallthru
        _
    $region6: #{tpu_custom_call.1} parent=1 // loop_footer
      %s29 = sadd.s32 1, %s25
    $region7: #{tpu_custom_call.1} parent=1 // loop_footer_branch
      %24 = sbr.rel target = $region3
    $region8: #{tpu_custom_call.1} parent=1 // loop_exit
      _
    %446 = vsyncpa [#allocation6], 1
    %s447 = scalar_lea.sflag [#allocation6], 1
    %448 = vsyncpa %s447, 1
    %449 = vsyncpa [#allocation7], 1
    %s450 = scalar_lea.sflag [#allocation7], 1
    %451 = vsyncpa %s450, 1

</llo_original>
